<compile_context>
chip_gen: v5e
topology: v5e:2x2
jax: 0.10.0
libtpu: 0.0.40
codegen_flags: <defaults>
</compile_context>

<pallas_src>
import jax
import jax.numpy as jnp
from jax.experimental import pallas as pl
from jax.experimental.pallas import tpu as pltpu


def _bond_float_rbf_kernel(x_ref, sel_ref, cen_ref, w_ref, b_ref, out_ref):
    """One grid step handles one tile of packed edge rows (G edges per row).

    x_ref   : f32 [rows, G*F]   packed bond float features (edge-major)
    sel_ref : f32 [G*F, G*C]    block-diag selector, entries sqrt(gamma_f)
    cen_ref : f32 [1, G*C]      sqrt(gamma)-scaled RBF centers, tiled G times
    w_ref   : f32 [G*C, G*D]    block-diag stacked Linear weights (W^T)
    b_ref   : f32 [1, G*D]      summed Linear biases, tiled G times
    out_ref : f32 [rows, G*D]   packed output (G embeddings per row, lane-dense)
    """
    # Broadcast each edge's feature value (pre-scaled by sqrt(gamma)) across
    # that feature's centers with a tiny MXU matmul: avoids per-feature
    # cross-lane relayouts and folds the gamma multiply into the matmul.
    x_bc = jnp.dot(x_ref[...], sel_ref[...], preferred_element_type=jnp.float32)
    d = x_bc - cen_ref[...]                     # sqrt(g)*(x - c)
    rbf = jnp.exp(-(d * d))                     # exp(-g*(x-c)^2), VPU + EUP
    out_ref[...] = (
        jnp.dot(rbf, w_ref[...], preferred_element_type=jnp.float32)  # single fused MXU pass
        + b_ref[...]
    )


def build_fused_params(feature_params, embed_dim):
    """Precompute ALL kernel constants once (host/setup time, not per call).

    feature_params: list of (centers[C_i], gamma_i, W_i^T [C_i, D], b_i [D]).
    Returns a dict with block-diagonal / tiled constants for the packed kernel.
    """
    D = int(embed_dim)
    G = 128 // D if (D <= 128 and 128 % D == 0) else 1

    centers_scaled, sqrtg_cols, w_list, feat_sizes = [], [], [], []
    b_sum = None
    for centers, gamma, w_t, b in feature_params:
        c = jnp.asarray(centers, jnp.float32).reshape(-1)
        sg = float(gamma) ** 0.5
        centers_scaled.append(sg * c)
        sqrtg_cols.append(jnp.full((c.shape[0],), sg, jnp.float32))
        w_list.append(jnp.asarray(w_t, jnp.float32))
        bj = jnp.asarray(b, jnp.float32)
        b_sum = bj if b_sum is None else b_sum + bj
        feat_sizes.append(int(c.shape[0]))

    F = len(feature_params)
    cen = jnp.concatenate(centers_scaled)                     # [C_tot] (sqrt(g)*c)
    sqrtg = jnp.concatenate(sqrtg_cols)                       # [C_tot]
    w_cat = jnp.concatenate(w_list, axis=0)                   # [C_tot, D]
    C = int(cen.shape[0])
    feat_id = jnp.concatenate(
        [jnp.full((n,), i, jnp.int32) for i, n in enumerate(feat_sizes)])
    # Scaled 0/1 selector: sel[f, c] = sqrt(gamma_f) iff center c belongs to f.
    sel = (feat_id[None, :] == jnp.arange(F, dtype=jnp.int32)[:, None]
           ).astype(jnp.float32) * sqrtg[None, :]             # [F, C_tot]

    eye_g = jnp.eye(G, dtype=jnp.float32)
    sel_bd = jnp.kron(eye_g, sel)                              # [G*F, G*C]
    w_bd = jnp.kron(eye_g, w_cat)                              # [G*C, G*D]
    cen_rep = jnp.tile(cen, G)[None, :]                        # [1, G*C]
    b_rep = jnp.tile(b_sum, G)[None, :]                        # [1, G*D]

    return dict(sel_bd=sel_bd, w_bd=w_bd, cen_rep=cen_rep, b_rep=b_rep,
                num_feats=F, num_centers=C, embed_dim=D, group=G)


def bond_float_rbf(bond_float_features, fused, *, block_edges=16384):
    """bond_float_features: f32 [F, E]  ->  f32 [E, embed_dim]."""
    x = jnp.asarray(bond_float_features, jnp.float32)
    F, E = x.shape
    D = int(fused["embed_dim"])
    C = int(fused["num_centers"])
    G = int(fused["group"])
    assert F == int(fused["num_feats"])

    # ---- tiling policy -------------------------------------------------
    Ep_min = -(-E // G)                                  # packed rows needed
    # Target row tile: multiple of 8, big enough to amortize the ~0.35us/step
    # overhead, small enough that double-buffered in+out tiles stay well under
    # the 32 MiB scoped VMEM (also safe on v7x's 64 MiB physical VMEM).
    rows_target = min(max(block_edges // G, 8), 4096)
    rows_target = max(8, (rows_target // 8) * 8)
    # Prefer >= 2 grid steps (v7x has 2 TensorCores; "parallel" axis shards).
    half = ((Ep_min + 1) // 2 + 7) // 8 * 8
    rows = min(rows_target, max(8, half))
    # Pad packed rows up to a multiple of the fixed tile (NO rows=Ep fallback).
    Ep = -(-Ep_min // rows) * rows
    pad_edges = Ep * G - E
    if pad_edges:
        x = jnp.pad(x, ((0, 0), (0, pad_edges)))

    # [F, E'] -> [E', F] -> [E'/G, G*F]: edge-major packed layout.
    # TODO(synk): accept edge-major [E, F] input directly to skip this transpose pass.
    x_packed = x.T.reshape(Ep, G * F)

    out_packed = pl.pallas_call(
        _bond_float_rbf_kernel,
        out_shape=jax.ShapeDtypeStruct((Ep, G * D), jnp.float32),
        grid_spec=pltpu.PrefetchScalarGridSpec(
            num_scalar_prefetch=0,
            grid=(Ep // rows,),
            in_specs=[
                pl.BlockSpec((rows, G * F), lambda i: (i, 0)),
                # Constant-index full blocks: stay resident in VMEM across steps.
                pl.BlockSpec((G * F, G * C), lambda i: (0, 0)),
                pl.BlockSpec((1, G * C), lambda i: (0, 0)),
                pl.BlockSpec((G * C, G * D), lambda i: (0, 0)),
                pl.BlockSpec((1, G * D), lambda i: (0, 0)),
            ],
            out_specs=pl.BlockSpec((rows, G * D), lambda i: (i, 0)),
        ),
        compiler_params=pltpu.CompilerParams(
            dimension_semantics=("parallel",)),
    )(x_packed, fused["sel_bd"], fused["cen_rep"], fused["w_bd"], fused["b_rep"])

    return out_packed.reshape(Ep * G, D)[:E]


if __name__ == "__main__":
    key = jax.random.PRNGKey(0)

    # Module configuration (mirrors BondFloatRBF: per-name (centers, gamma) + Linear).
    bond_float_names = ["bond_length", "bond_angle"]
    rbf_params = {
        "bond_length": (jnp.arange(0.0, 2.0, 0.1, dtype=jnp.float32), 10.0),  # 20 centers
        "bond_angle": (jnp.arange(0.0, 3.2, 0.2, dtype=jnp.float32), 5.0),    # 16 centers
    }
    embed_dim = 32
    num_edges = 2048

    # Deterministic nn.Linear parameters per feature (weight^T [C, D], bias [D]).
    feature_params = []
    for i, name in enumerate(bond_float_names):
        centers, gamma = rbf_params[name]
        C = int(centers.shape[0])
        bound = C ** -0.5
        kw = jax.random.fold_in(key, 2 * i)
        kb = jax.random.fold_in(key, 2 * i + 1)
        w_t = jax.random.uniform(kw, (C, embed_dim), jnp.float32, -bound, bound)
        b = jax.random.uniform(kb, (embed_dim,), jnp.float32, -bound, bound)
        feature_params.append((centers, float(gamma), w_t, b))

    # Deterministic bond float features: [F, E].
    feat_rows = []
    for i, name in enumerate(bond_float_names):
        k = jax.random.fold_in(key, 100 + i)
        hi = float(rbf_params[name][0][-1]) + 0.1
        feat_rows.append(jax.random.uniform(k, (num_edges,), jnp.float32, 0.0, hi))
    bond_float_features = jnp.stack(feat_rows, axis=0)

    fused = build_fused_params(feature_params, embed_dim)
    out = bond_float_rbf(bond_float_features, fused)
    out = jax.block_until_ready(out)

    # Pure-JAX reference (matches the PyTorch forward).
    ref = jnp.zeros((num_edges, embed_dim), jnp.float32)
    for i, (centers, gamma, w_t, b) in enumerate(feature_params):
        xf = bond_float_features[i]
        rbf = jnp.exp(-gamma * (xf[:, None] - centers[None, :]) ** 2)
        ref = ref + jnp.dot(rbf, w_t, precision=jax.lax.Precision.HIGHEST) + b

    assert out.shape == (num_edges, embed_dim) and out.dtype == jnp.float32
    assert jnp.allclose(out, ref, atol=1e-3, rtol=1e-3), \
        float(jnp.max(jnp.abs(out - ref)))

    print("KERNEL_OK")
</pallas_src>

<mosaic_0001>
module attributes {stable_mosaic.version = 11 : i64} {
  func.func @_bond_float_rbf_kernel(%arg0: i32, %arg1: memref<256x8xf32, #tpu.memory_space<vmem>>, %arg2: memref<8x144xf32, #tpu.memory_space<vmem>>, %arg3: memref<1x144xf32, #tpu.memory_space<vmem>>, %arg4: memref<144x128xf32, #tpu.memory_space<vmem>>, %arg5: memref<1x128xf32, #tpu.memory_space<vmem>>, %arg6: memref<256x128xf32, #tpu.memory_space<vmem>>) attributes {dimension_semantics = [#tpu.dimension_semantics<parallel>], iteration_bounds = array<i64: 2>, scalar_prefetch = 0 : i64, scratch_operands = 0 : i64, tpu.core_type = #tpu.core_type<tc>, window_params = [{transform_indices = @transform_0, window_bounds = array<i64: 256, 8>}, {pipeline_mode = #tpu.pipeline_mode<synchronous>, transform_indices = @transform_1, window_bounds = array<i64: 8, 144>}, {pipeline_mode = #tpu.pipeline_mode<synchronous>, transform_indices = @transform_2, window_bounds = array<i64: 1, 144>}, {pipeline_mode = #tpu.pipeline_mode<synchronous>, transform_indices = @transform_3, window_bounds = array<i64: 144, 128>}, {pipeline_mode = #tpu.pipeline_mode<synchronous>, transform_indices = @transform_4, window_bounds = array<i64: 1, 128>}, {transform_indices = @transform_5, window_bounds = array<i64: 256, 128>}]} {
    %c0 = arith.constant 0 : index
    %c0_0 = arith.constant 0 : index
    %0 = vector.load %arg1[%c0, %c0_0] : memref<256x8xf32, #tpu.memory_space<vmem>>, vector<256x8xf32>
    %c0_1 = arith.constant 0 : index
    %c0_2 = arith.constant 0 : index
    %1 = vector.load %arg2[%c0_1, %c0_2] : memref<8x144xf32, #tpu.memory_space<vmem>>, vector<8x144xf32>
    %cst = arith.constant dense<0.000000e+00> : vector<256x144xf32>
    %2 = tpu.matmul %0, %1, %cst {dimension_numbers = #tpu.dot_dimension_numbers<[1], [0], [0], [1], [0, 0, 1, 1], [], []>} : vector<256x8xf32>, vector<8x144xf32>, vector<256x144xf32> -> vector<256x144xf32>
    %c0_3 = arith.constant 0 : index
    %c0_4 = arith.constant 0 : index
    %3 = vector.load %arg3[%c0_3, %c0_4] : memref<1x144xf32, #tpu.memory_space<vmem>>, vector<1x144xf32>
    %4 = vector.broadcast %3 : vector<1x144xf32> to vector<256x144xf32>
    %5 = arith.subf %2, %4 : vector<256x144xf32>
    %6 = arith.mulf %5, %5 : vector<256x144xf32>
    %cst_5 = arith.constant 0.000000e+00 : f32
    %7 = vector.broadcast %cst_5 : f32 to vector<256x144xf32>
    %8 = arith.subf %7, %6 : vector<256x144xf32>
    %9 = math.exp %8 : vector<256x144xf32>
    %c0_6 = arith.constant 0 : index
    %c0_7 = arith.constant 0 : index
    %10 = vector.load %arg4[%c0_6, %c0_7] : memref<144x128xf32, #tpu.memory_space<vmem>>, vector<144x128xf32>
    %cst_8 = arith.constant dense<0.000000e+00> : vector<256x128xf32>
    %11 = tpu.matmul %9, %10, %cst_8 {dimension_numbers = #tpu.dot_dimension_numbers<[1], [0], [0], [1], [0, 0, 1, 1], [], []>} : vector<256x144xf32>, vector<144x128xf32>, vector<256x128xf32> -> vector<256x128xf32>
    %c0_9 = arith.constant 0 : index
    %c0_10 = arith.constant 0 : index
    %12 = vector.load %arg5[%c0_9, %c0_10] : memref<1x128xf32, #tpu.memory_space<vmem>>, vector<1x128xf32>
    %13 = vector.broadcast %12 : vector<1x128xf32> to vector<256x128xf32>
    %14 = arith.addf %11, %13 : vector<256x128xf32>
    %c0_11 = arith.constant 0 : index
    %c0_12 = arith.constant 0 : index
    %15 = vector.load %arg6[%c0_11, %c0_12] : memref<256x128xf32, #tpu.memory_space<vmem>>, vector<256x128xf32>
    tpu.vector_store %arg6[%c0_11, %c0_12], %14 {strides = array<i32>} : memref<256x128xf32, #tpu.memory_space<vmem>>, vector<256x128xf32>,
    return
  }
  func.func @transform_0(%arg0: i32) -> (i32, i32) {
    %c0_i32 = arith.constant 0 : i32
    %c0_i32_0 = arith.constant 0 : i32
    return %arg0, %c0_i32 : i32, i32
  }
  func.func @transform_1(%arg0: i32) -> (i32, i32) {
    %c0_i32 = arith.constant 0 : i32
    %c0_i32_0 = arith.constant 0 : i32
    %c0_i32_1 = arith.constant 0 : i32
    return %c0_i32, %c0_i32_0 : i32, i32
  }
  func.func @transform_2(%arg0: i32) -> (i32, i32) {
    %c0_i32 = arith.constant 0 : i32
    %c0_i32_0 = arith.constant 0 : i32
    %c0_i32_1 = arith.constant 0 : i32
    return %c0_i32, %c0_i32_0 : i32, i32
  }
  func.func @transform_3(%arg0: i32) -> (i32, i32) {
    %c0_i32 = arith.constant 0 : i32
    %c0_i32_0 = arith.constant 0 : i32
    %c0_i32_1 = arith.constant 0 : i32
    return %c0_i32, %c0_i32_0 : i32, i32
  }
  func.func @transform_4(%arg0: i32) -> (i32, i32) {
    %c0_i32 = arith.constant 0 : i32
    %c0_i32_0 = arith.constant 0 : i32
    %c0_i32_1 = arith.constant 0 : i32
    return %c0_i32, %c0_i32_0 : i32, i32
  }
  func.func @transform_5(%arg0: i32) -> (i32, i32) {
    %c0_i32 = arith.constant 0 : i32
    %c0_i32_0 = arith.constant 0 : i32
    return %arg0, %c0_i32 : i32, i32
  }
}

</mosaic_0001>

<llo_original>
// kernel: tpu_custom_call.1
$region0: #{tpu_custom_call.1}
  #allocation0 [shape = 'u32[]', space=smem, size = 0x4, offset = 0x4, fixed_abs, tag = 'smem constant byte address 0x4 - core index']
  #allocation1 [shape = 'u32[72,128]{1,0:T(1,128)}', space=vmem, size = 0x9000, scoped, tag = 'internal scratch']
  %s0 = inlined_call_operand.vmem [shape: f32[512,8], index: 0, kind: input, shape index: {}]
  %s1 = inlined_call_operand.vmem [shape: f32[8,144], index: 1, kind: input, shape index: {}]
  %s2 = inlined_call_operand.vmem [shape: f32[1,144], index: 2, kind: input, shape index: {}]
  %s3 = inlined_call_operand.vmem [shape: f32[144,128], index: 3, kind: input, shape index: {}]
  %s4 = inlined_call_operand.vmem [shape: f32[1,128], index: 4, kind: input, shape index: {}]
  %s5 = inlined_call_operand.hbm [shape: f32[512,128], index: 5, kind: output, shape index: {}]
  %s6 = sld [smem:[#allocation0]]
  $region53: #{tpu_custom_call.1} parent=0
    _
  %s8 = ssub.s32 1, %s6
  %s9 = scalar_select 0, %s8, %s6
  $region1: #{tpu_custom_call.1} parent=0
    #allocation2 [shape = 'u8[262144]{0}', space=vmem, size = 0x40000, scoped, tag = 'output window, operand 0']
    #allocation3 [shape = 's32[2]{0}', space=sflag, size = 0x8, scoped, tag = 'scoped memory for tpu_custom_call.1']
    %10 = vsyncpa [#allocation3], 0
    %s11 = scalar_lea.sflag [#allocation3], 1
    %12 = vsyncpa %s11, 0
    loop: start=0, step=1, limit=4
    $region2: #{tpu_custom_call.1} parent=1 // loop_pre_header
      _
    $region3: #{tpu_custom_call.1} parent=1 // loop_header
      %s14 = sphi 0, %s18
      %p15 = scmp.ge.s32.totalorder %s14, 4
      %s24 = sphi 0, %s26
      %s27 = sphi 0, %s24
      %s28 = sphi 0, %s27
      %s44 = sphi 0, %s28
      %s48 = sphi 0, %s48
      %s50 = sphi 0, %s48
      %s51 = sphi 0, %s50
      %s65 = sphi 0, %s51
      %s69 = sphi 0, %s69
      %s71 = sphi 0, %s69
      %s72 = sphi 0, %s71
      %s86 = sphi 0, %s72
      %s90 = sphi 0, %s90
      %s92 = sphi 0, %s90
      %s93 = sphi 0, %s92
      %s107 = sphi 0, %s93
      %s111 = sphi 0, %s111
      %s113 = sphi 0, %s111
      %s114 = sphi 0, %s113
      %s128 = sphi 0, %s114
      %s134 = sphi 0, %s136
      %s137 = sphi 0, %s134
      %s138 = sphi 0, %s137
      %s154 = sphi 0, %s138
    $region4: #{tpu_custom_call.1} parent=1 // loop_header_branch
      %17 = sbr.rel (%p15) target = $region8
    $region5: #{tpu_custom_call.1} parent=1 // loop_body
      %s19 = ssub.s32 %s14, 1
      %s20 = ssub.s32 %s14, 2
      %s21 = sadd.s32 %s14, 1
      %s22 = ssub.s32 %s14, %s21
      %p23 = scmp.eq.s32.totalorder %s22, 0
      %s25 = sadd.s32 %s24, 1
      %s26 = scalar_select %p23, %s24, %s25
      %p29 = pneg %p23
      %p30 = scmp.eq.s32.totalorder %s14, 1
      %p31 = por %p29, %p30
      %p32 = scmp.ne.s32.totalorder %s24, %s27
      %p33 = scmp.eq.s32.totalorder %s14, 0
      %p34 = por %p32, %p33
      %p35 = scmp.ne.s32.totalorder %s24, %s27
      %p36 = scmp.eq.s32.totalorder %s19, 1
      %p37 = por %p35, %p36
      %p38 = scmp.ne.s32.totalorder %s27, %s28
      %p39 = scmp.eq.s32.totalorder %s19, 0
      %p40 = por %p38, %p39
      %p41 = scmp.ne.s32.totalorder %s27, %s28
      %p42 = scmp.eq.s32.totalorder %s20, 1
      %p43 = por %p41, %p42
      %p45 = scmp.ne.s32.totalorder %s28, %s44
      %p46 = scmp.eq.s32.totalorder %s20, 0
      %p47 = por %p45, %p46
      %s49 = sadd.s32 %s48, 1
      %p52 = scmp.eq.s32.totalorder %s14, 1
      %p53 = scmp.ne.s32.totalorder %s48, %s50
      %p54 = scmp.eq.s32.totalorder %s14, 0
      %p55 = por %p53, %p54
      %p56 = scmp.ne.s32.totalorder %s48, %s50
      %p57 = scmp.eq.s32.totalorder %s19, 1
      %p58 = por %p56, %p57
      %p59 = scmp.ne.s32.totalorder %s50, %s51
      %p60 = scmp.eq.s32.totalorder %s19, 0
      %p61 = por %p59, %p60
      %p62 = scmp.ne.s32.totalorder %s50, %s51
      %p63 = scmp.eq.s32.totalorder %s20, 1
      %p64 = por %p62, %p63
      %p66 = scmp.ne.s32.totalorder %s51, %s65
      %p67 = scmp.eq.s32.totalorder %s20, 0
      %p68 = por %p66, %p67
      %s70 = sadd.s32 %s69, 1
      %p73 = scmp.eq.s32.totalorder %s14, 1
      %p74 = scmp.ne.s32.totalorder %s69, %s71
      %p75 = scmp.eq.s32.totalorder %s14, 0
      %p76 = por %p74, %p75
      %p77 = scmp.ne.s32.totalorder %s69, %s71
      %p78 = scmp.eq.s32.totalorder %s19, 1
      %p79 = por %p77, %p78
      %p80 = scmp.ne.s32.totalorder %s71, %s72
      %p81 = scmp.eq.s32.totalorder %s19, 0
      %p82 = por %p80, %p81
      %p83 = scmp.ne.s32.totalorder %s71, %s72
      %p84 = scmp.eq.s32.totalorder %s20, 1
      %p85 = por %p83, %p84
      %p87 = scmp.ne.s32.totalorder %s72, %s86
      %p88 = scmp.eq.s32.totalorder %s20, 0
      %p89 = por %p87, %p88
      %s91 = sadd.s32 %s90, 1
      %p94 = scmp.eq.s32.totalorder %s14, 1
      %p95 = scmp.ne.s32.totalorder %s90, %s92
      %p96 = scmp.eq.s32.totalorder %s14, 0
      %p97 = por %p95, %p96
      %p98 = scmp.ne.s32.totalorder %s90, %s92
      %p99 = scmp.eq.s32.totalorder %s19, 1
      %p100 = por %p98, %p99
      %p101 = scmp.ne.s32.totalorder %s92, %s93
      %p102 = scmp.eq.s32.totalorder %s19, 0
      %p103 = por %p101, %p102
      %p104 = scmp.ne.s32.totalorder %s92, %s93
      %p105 = scmp.eq.s32.totalorder %s20, 1
      %p106 = por %p104, %p105
      %p108 = scmp.ne.s32.totalorder %s93, %s107
      %p109 = scmp.eq.s32.totalorder %s20, 0
      %p110 = por %p108, %p109
      %s112 = sadd.s32 %s111, 1
      %p115 = scmp.eq.s32.totalorder %s14, 1
      %p116 = scmp.ne.s32.totalorder %s111, %s113
      %p117 = scmp.eq.s32.totalorder %s14, 0
      %p118 = por %p116, %p117
      %p119 = scmp.ne.s32.totalorder %s111, %s113
      %p120 = scmp.eq.s32.totalorder %s19, 1
      %p121 = por %p119, %p120
      %p122 = scmp.ne.s32.totalorder %s113, %s114
      %p123 = scmp.eq.s32.totalorder %s19, 0
      %p124 = por %p122, %p123
      %p125 = scmp.ne.s32.totalorder %s113, %s114
      %p126 = scmp.eq.s32.totalorder %s20, 1
      %p127 = por %p125, %p126
      %p129 = scmp.ne.s32.totalorder %s114, %s128
      %p130 = scmp.eq.s32.totalorder %s20, 0
      %p131 = por %p129, %p130
      %s132 = ssub.s32 %s14, %s21
      %p133 = scmp.eq.s32.totalorder %s132, 0
      %s135 = sadd.s32 %s134, 1
      %s136 = scalar_select %p133, %s134, %s135
      %p139 = pneg %p133
      %p140 = scmp.eq.s32.totalorder %s14, 1
      %p141 = por %p139, %p140
      %p142 = scmp.ne.s32.totalorder %s134, %s137
      %p143 = scmp.eq.s32.totalorder %s14, 0
      %p144 = por %p142, %p143
      %p145 = scmp.ne.s32.totalorder %s134, %s137
      %p146 = scmp.eq.s32.totalorder %s19, 1
      %p147 = por %p145, %p146
      %p148 = scmp.ne.s32.totalorder %s137, %s138
      %p149 = scmp.eq.s32.totalorder %s19, 0
      %p150 = por %p148, %p149
      %p151 = scmp.ne.s32.totalorder %s137, %s138
      %p152 = scmp.eq.s32.totalorder %s20, 1
      %p153 = por %p151, %p152
      %p155 = scmp.ne.s32.totalorder %s138, %s154
      %p156 = scmp.eq.s32.totalorder %s20, 0
      %p157 = por %p155, %p156
      %p158 = scmp.le.s32.totalorder 1, %s14
      %p159 = scmp.lt.s32.totalorder %s14, 3
      %p160 = pnand %p158, %p159
      %p161 = pneg %p160
      // Predicated region
      $region9: #{tpu_custom_call.1} parent=5 // pred_check
        _
      $region10: #{tpu_custom_call.1} parent=5 // pred_check_branch
        %163 = sbr.rel (%p160) target = $region12
      $region11: #{tpu_custom_call.1} parent=5 // pred_region
        %s164 = ssub.s32 %s14, 1
        // Predicated region
        $region13: #{tpu_custom_call.1} parent=11 // pred_check
          %p165 = pneg %p61
        $region14: #{tpu_custom_call.1} parent=11 // pred_check_branch
          %167 = sbr.rel (%p165) target = $region16
        $region15: #{tpu_custom_call.1} parent=11 // pred_region
          _
        $region16: #{tpu_custom_call.1} parent=11 // pred_fallthru
          _
        // Predicated region
        $region17: #{tpu_custom_call.1} parent=11 // pred_check
          %p168 = pneg %p82
        $region18: #{tpu_custom_call.1} parent=11 // pred_check_branch
          %170 = sbr.rel (%p168) target = $region20
        $region19: #{tpu_custom_call.1} parent=11 // pred_region
          _
        $region20: #{tpu_custom_call.1} parent=11 // pred_fallthru
          _
        // Predicated region
        $region21: #{tpu_custom_call.1} parent=11 // pred_check
          %p171 = pneg %p103
        $region22: #{tpu_custom_call.1} parent=11 // pred_check_branch
          %173 = sbr.rel (%p171) target = $region24
        $region23: #{tpu_custom_call.1} parent=11 // pred_region
          _
        $region24: #{tpu_custom_call.1} parent=11 // pred_fallthru
          _
        // Predicated region
        $region25: #{tpu_custom_call.1} parent=11 // pred_check
          %p174 = pneg %p124
        $region26: #{tpu_custom_call.1} parent=11 // pred_check_branch
          %176 = sbr.rel (%p174) target = $region28
        $region27: #{tpu_custom_call.1} parent=11 // pred_region
          _
        $region28: #{tpu_custom_call.1} parent=11 // pred_fallthru
          _
      $region12: #{tpu_custom_call.1} parent=5 // pred_fallthru
        _
      %p177 = scmp.lt.s32.totalorder %s14, 2
      // Predicated region
      $region29: #{tpu_custom_call.1} parent=5 // pred_check
        %p178 = pneg %p177
      $region30: #{tpu_custom_call.1} parent=5 // pred_check_branch
        %180 = sbr.rel (%p178) target = $region32
      $region31: #{tpu_custom_call.1} parent=5 // pred_region
        // Predicated region
        $region33: #{tpu_custom_call.1} parent=31 // pred_check
          %p181 = pneg %p34
        $region34: #{tpu_custom_call.1} parent=31 // pred_check_branch
          %183 = sbr.rel (%p181) target = $region36
        $region35: #{tpu_custom_call.1} parent=31 // pred_region
          %s184 = smul.u32 32, %s14
          %p185 = scmp.lt.s32.totalorder %s184, 63
          %s186 = scalar_select %p185, %s184, 63
          %s187 = smul.addr %s186, 8
          %s188 = scalar_lea.vmem %s0, %s187
          %s189 = smul.u32 32, %s14
        $region36: #{tpu_custom_call.1} parent=31 // pred_fallthru
          _
      $region32: #{tpu_custom_call.1} parent=5 // pred_fallthru
        _
      %p190 = scmp.le.s32.totalorder 1, %s14
      %p191 = scmp.lt.s32.totalorder %s14, 3
      %p192 = pnand %p190, %p191
      %p193 = pneg %p192
      // Predicated region
      $region37: #{tpu_custom_call.1} parent=5 // pred_check
        _
      $region38: #{tpu_custom_call.1} parent=5 // pred_check_branch
        %195 = sbr.rel (%p192) target = $region40
      $region39: #{tpu_custom_call.1} parent=5 // pred_region
        %s196 = ssub.s32 %s14, 1
        %s197 = smul.u32 32, %s19
        %p198 = scmp.lt.s32.totalorder %s197, 63
        %s199 = scalar_select %p198, %s197, 63
        %s200 = smul.addr %s199, 8
        %s201 = scalar_lea.vmem %s0, %s200
        %p202 = pneg %p40
        %p203 = pneg %p37
        %p204 = pneg %p61
        %p205 = pneg %p58
        %p206 = pneg %p82
        %p207 = pneg %p79
        %p208 = pneg %p103
        %p209 = pneg %p100
        %p210 = pneg %p124
        %p211 = pneg %p121
        %p212 = pneg %p150
        %p213 = pneg %p147
        %s214 = sand.u32 %s137, 1
        %s215 = scalar_lea.sflag [#allocation3], %s214
        %s216 = sand.u32 %s137, 1
        %s217 = smul.addr %s216, 256
        %s218 = scalar_lea.vmem [#allocation2], %s217
        %s219 = smul.u32 32, %s19
        %p220 = scmp.lt.s32.totalorder %s219, 63
        %s221 = scalar_select %p220, %s219, 63
        %s222 = smul.addr %s221, 8
        %s223 = scalar_lea.vmem %s0, %s222
        %s224 = smul.u32 32, %s19
        %s225 = smul.u32 32, %s19
        %v226 = vld [vmem:[%s223] sm:$0xff]
        %v227 = vld [vmem:[%s223 + $0x8] sm:$0xff]
        %v228 = vld [vmem:[%s223 + $0x10] sm:$0xff]
        %v229 = vld [vmem:[%s223 + $0x18] sm:$0xff]
        %v230 = vld [vmem:[%s223 + $0x20] sm:$0xff]
        %v231 = vld [vmem:[%s223 + $0x28] sm:$0xff]
        %v232 = vld [vmem:[%s223 + $0x30] sm:$0xff]
        %v233 = vld [vmem:[%s223 + $0x38] sm:$0xff]
        %v234 = vld [vmem:[%s223 + $0x40] sm:$0xff]
        %v235 = vld [vmem:[%s223 + $0x48] sm:$0xff]
        %v236 = vld [vmem:[%s223 + $0x50] sm:$0xff]
        %v237 = vld [vmem:[%s223 + $0x58] sm:$0xff]
        %v238 = vld [vmem:[%s223 + $0x60] sm:$0xff]
        %v239 = vld [vmem:[%s223 + $0x68] sm:$0xff]
        %v240 = vld [vmem:[%s223 + $0x70] sm:$0xff]
        %v241 = vld [vmem:[%s223 + $0x78] sm:$0xff]
        %v242 = vld [vmem:[%s223 + $0x80] sm:$0xff]
        %v243 = vld [vmem:[%s223 + $0x88] sm:$0xff]
        %v244 = vld [vmem:[%s223 + $0x90] sm:$0xff]
        %v245 = vld [vmem:[%s223 + $0x98] sm:$0xff]
        %v246 = vld [vmem:[%s223 + $0xa0] sm:$0xff]
        %v247 = vld [vmem:[%s223 + $0xa8] sm:$0xff]
        %v248 = vld [vmem:[%s223 + $0xb0] sm:$0xff]
        %v249 = vld [vmem:[%s223 + $0xb8] sm:$0xff]
        %v250 = vld [vmem:[%s223 + $0xc0] sm:$0xff]
        %v251 = vld [vmem:[%s223 + $0xc8] sm:$0xff]
        %v252 = vld [vmem:[%s223 + $0xd0] sm:$0xff]
        %v253 = vld [vmem:[%s223 + $0xd8] sm:$0xff]
        %v254 = vld [vmem:[%s223 + $0xe0] sm:$0xff]
        %v255 = vld [vmem:[%s223 + $0xe8] sm:$0xff]
        %v256 = vld [vmem:[%s223 + $0xf0] sm:$0xff]
        %v257 = vld [vmem:[%s223 + $0xf8] sm:$0xff]
        %v258 = vld [vmem:[%s1] sm:$0xff]
        %v259 = vld [vmem:[%s1 + $0x8] sm:$0xff]
        %vm260 = vcmask 64512
        %v262 = vsel %vm260, %v226, 0
        %v265 = vsel %vm260, %v227, 0
        %v268 = vsel %vm260, %v228, 0
        %v271 = vsel %vm260, %v229, 0
        %v274 = vsel %vm260, %v230, 0
        %v277 = vsel %vm260, %v231, 0
        %v280 = vsel %vm260, %v232, 0
        %v283 = vsel %vm260, %v233, 0
        %v286 = vsel %vm260, %v234, 0
        %v289 = vsel %vm260, %v235, 0
        %v292 = vsel %vm260, %v236, 0
        %v295 = vsel %vm260, %v237, 0
        %v298 = vsel %vm260, %v238, 0
        %v301 = vsel %vm260, %v239, 0
        %v304 = vsel %vm260, %v240, 0
        %v307 = vsel %vm260, %v241, 0
        %v310 = vsel %vm260, %v242, 0
        %v313 = vsel %vm260, %v243, 0
        %v316 = vsel %vm260, %v244, 0
        %v319 = vsel %vm260, %v245, 0
        %v322 = vsel %vm260, %v246, 0
        %v325 = vsel %vm260, %v247, 0
        %v328 = vsel %vm260, %v248, 0
        %v331 = vsel %vm260, %v249, 0
        %v334 = vsel %vm260, %v250, 0
        %v337 = vsel %vm260, %v251, 0
        %v340 = vsel %vm260, %v252, 0
        %v343 = vsel %vm260, %v253, 0
        %v346 = vsel %vm260, %v254, 0
        %v349 = vsel %vm260, %v255, 0
        %v352 = vsel %vm260, %v256, 0
        %v355 = vsel %vm260, %v257, 0
        %357 = vmatpush.msra.mxu0 0.0
        %358 = vmatpush.msra.mxu0 0.0
        %359 = vmatpush.msra.mxu0 0.0
        %360 = vmatpush.msra.mxu0 0.0
        %361 = vmatpush.msra.mxu0 0.0
        %362 = vmatpush.msra.mxu0 0.0
        %363 = vmatpush.msra.mxu0 0.0
        %364 = vmatpush.msra.mxu0 0.0
        %365 = vmatpush.msra.mxu0 0.0
        %366 = vmatpush.msra.mxu0 0.0
        %367 = vmatpush.msra.mxu0 0.0
        %368 = vmatpush.msra.mxu0 0.0
        %369 = vmatpush.msra.mxu0 0.0
        %370 = vmatpush.msra.mxu0 0.0
        %371 = vmatpush.msra.mxu0 0.0
        %372 = vmatpush.msra.mxu0 %v258
        %373 = vmatmul.f32.gmra.mxu0 %v262
        %v374 = vpop.f32.mrf.mxu0
        %v375 = vadd.f32 0.0, %v374
        %376 = vmatmul.f32.gmra.mxu0 %v265
        %v377 = vpop.f32.mrf.mxu0
        %v378 = vadd.f32 0.0, %v377
        %379 = vmatmul.f32.gmra.mxu0 %v268
        %v380 = vpop.f32.mrf.mxu0
        %v381 = vadd.f32 0.0, %v380
        %382 = vmatmul.f32.gmra.mxu0 %v271
        %v383 = vpop.f32.mrf.mxu0
        %v384 = vadd.f32 0.0, %v383
        %385 = vmatmul.f32.gmra.mxu0 %v274
        %v386 = vpop.f32.mrf.mxu0
        %v387 = vadd.f32 0.0, %v386
        %388 = vmatmul.f32.gmra.mxu0 %v277
        %v389 = vpop.f32.mrf.mxu0
        %v390 = vadd.f32 0.0, %v389
        %391 = vmatmul.f32.gmra.mxu0 %v280
        %v392 = vpop.f32.mrf.mxu0
        %v393 = vadd.f32 0.0, %v392
        %394 = vmatmul.f32.gmra.mxu0 %v283
        %v395 = vpop.f32.mrf.mxu0
        %v396 = vadd.f32 0.0, %v395
        %397 = vmatmul.f32.gmra.mxu0 %v286
        %v398 = vpop.f32.mrf.mxu0
        %v399 = vadd.f32 0.0, %v398
        %400 = vmatmul.f32.gmra.mxu0 %v289
        %v401 = vpop.f32.mrf.mxu0
        %v402 = vadd.f32 0.0, %v401
        %403 = vmatmul.f32.gmra.mxu0 %v292
        %v404 = vpop.f32.mrf.mxu0
        %v405 = vadd.f32 0.0, %v404
        %406 = vmatmul.f32.gmra.mxu0 %v295
        %v407 = vpop.f32.mrf.mxu0
        %v408 = vadd.f32 0.0, %v407
        %409 = vmatmul.f32.gmra.mxu0 %v298
        %v410 = vpop.f32.mrf.mxu0
        %v411 = vadd.f32 0.0, %v410
        %412 = vmatmul.f32.gmra.mxu0 %v301
        %v413 = vpop.f32.mrf.mxu0
        %v414 = vadd.f32 0.0, %v413
        %415 = vmatmul.f32.gmra.mxu0 %v304
        %v416 = vpop.f32.mrf.mxu0
        %v417 = vadd.f32 0.0, %v416
        %418 = vmatmul.f32.gmra.mxu0 %v307
        %v419 = vpop.f32.mrf.mxu0
        %v420 = vadd.f32 0.0, %v419
        %421 = vmatmul.f32.gmra.mxu0 %v310
        %v422 = vpop.f32.mrf.mxu0
        %v423 = vadd.f32 0.0, %v422
        %424 = vmatmul.f32.gmra.mxu0 %v313
        %v425 = vpop.f32.mrf.mxu0
        %v426 = vadd.f32 0.0, %v425
        %427 = vmatmul.f32.gmra.mxu0 %v316
        %v428 = vpop.f32.mrf.mxu0
        %v429 = vadd.f32 0.0, %v428
        %430 = vmatmul.f32.gmra.mxu0 %v319
        %v431 = vpop.f32.mrf.mxu0
        %v432 = vadd.f32 0.0, %v431
        %433 = vmatmul.f32.gmra.mxu0 %v322
        %v434 = vpop.f32.mrf.mxu0
        %v435 = vadd.f32 0.0, %v434
        %436 = vmatmul.f32.gmra.mxu0 %v325
        %v437 = vpop.f32.mrf.mxu0
        %v438 = vadd.f32 0.0, %v437
        %439 = vmatmul.f32.gmra.mxu0 %v328
        %v440 = vpop.f32.mrf.mxu0
        %v441 = vadd.f32 0.0, %v440
        %442 = vmatmul.f32.gmra.mxu0 %v331
        %v443 = vpop.f32.mrf.mxu0
        %v444 = vadd.f32 0.0, %v443
        %445 = vmatmul.f32.gmra.mxu0 %v334
        %v446 = vpop.f32.mrf.mxu0
        %v447 = vadd.f32 0.0, %v446
        %448 = vmatmul.f32.gmra.mxu0 %v337
        %v449 = vpop.f32.mrf.mxu0
        %v450 = vadd.f32 0.0, %v449
        %451 = vmatmul.f32.gmra.mxu0 %v340
        %v452 = vpop.f32.mrf.mxu0
        %v453 = vadd.f32 0.0, %v452
        %454 = vmatmul.f32.gmra.mxu0 %v343
        %v455 = vpop.f32.mrf.mxu0
        %v456 = vadd.f32 0.0, %v455
        %457 = vmatmul.f32.gmra.mxu0 %v346
        %v458 = vpop.f32.mrf.mxu0
        %v459 = vadd.f32 0.0, %v458
        %460 = vmatmul.f32.gmra.mxu0 %v349
        %v461 = vpop.f32.mrf.mxu0
        %v462 = vadd.f32 0.0, %v461
        %463 = vmatmul.f32.gmra.mxu0 %v352
        %v464 = vpop.f32.mrf.mxu0
        %v465 = vadd.f32 0.0, %v464
        %466 = vmatmul.f32.gmra.mxu0 %v355
        %v467 = vpop.f32.mrf.mxu0
        %v468 = vadd.f32 0.0, %v467
        %469 = vdwg.mxu0
        %470 = vmatpush.msra.mxu0 0.0
        %471 = vmatpush.msra.mxu0 0.0
        %472 = vmatpush.msra.mxu0 0.0
        %473 = vmatpush.msra.mxu0 0.0
        %474 = vmatpush.msra.mxu0 0.0
        %475 = vmatpush.msra.mxu0 0.0
        %476 = vmatpush.msra.mxu0 0.0
        %477 = vmatpush.msra.mxu0 0.0
        %478 = vmatpush.msra.mxu0 0.0
        %479 = vmatpush.msra.mxu0 0.0
        %480 = vmatpush.msra.mxu0 0.0
        %481 = vmatpush.msra.mxu0 0.0
        %482 = vmatpush.msra.mxu0 0.0
        %483 = vmatpush.msra.mxu0 0.0
        %484 = vmatpush.msra.mxu0 0.0
        %485 = vmatpush.msra.mxu0 %v259
        %486 = vmatmul.f32.gmra.mxu0 %v262
        %v487 = vpop.f32.mrf.mxu0
        %v488 = vadd.f32 0.0, %v487
        %489 = vmatmul.f32.gmra.mxu0 %v265
        %v490 = vpop.f32.mrf.mxu0
        %v491 = vadd.f32 0.0, %v490
        %492 = vmatmul.f32.gmra.mxu0 %v268
        %v493 = vpop.f32.mrf.mxu0
        %v494 = vadd.f32 0.0, %v493
        %495 = vmatmul.f32.gmra.mxu0 %v271
        %v496 = vpop.f32.mrf.mxu0
        %v497 = vadd.f32 0.0, %v496
        %498 = vmatmul.f32.gmra.mxu0 %v274
        %v499 = vpop.f32.mrf.mxu0
        %v500 = vadd.f32 0.0, %v499
        %501 = vmatmul.f32.gmra.mxu0 %v277
        %v502 = vpop.f32.mrf.mxu0
        %v503 = vadd.f32 0.0, %v502
        %504 = vmatmul.f32.gmra.mxu0 %v280
        %v505 = vpop.f32.mrf.mxu0
        %v506 = vadd.f32 0.0, %v505
        %507 = vmatmul.f32.gmra.mxu0 %v283
        %v508 = vpop.f32.mrf.mxu0
        %v509 = vadd.f32 0.0, %v508
        %510 = vmatmul.f32.gmra.mxu0 %v286
        %v511 = vpop.f32.mrf.mxu0
        %v512 = vadd.f32 0.0, %v511
        %513 = vmatmul.f32.gmra.mxu0 %v289
        %v514 = vpop.f32.mrf.mxu0
        %v515 = vadd.f32 0.0, %v514
        %516 = vmatmul.f32.gmra.mxu0 %v292
        %v517 = vpop.f32.mrf.mxu0
        %v518 = vadd.f32 0.0, %v517
        %519 = vmatmul.f32.gmra.mxu0 %v295
        %v520 = vpop.f32.mrf.mxu0
        %v521 = vadd.f32 0.0, %v520
        %522 = vmatmul.f32.gmra.mxu0 %v298
        %v523 = vpop.f32.mrf.mxu0
        %v524 = vadd.f32 0.0, %v523
        %525 = vmatmul.f32.gmra.mxu0 %v301
        %v526 = vpop.f32.mrf.mxu0
        %v527 = vadd.f32 0.0, %v526
        %528 = vmatmul.f32.gmra.mxu0 %v304
        %v529 = vpop.f32.mrf.mxu0
        %v530 = vadd.f32 0.0, %v529
        %531 = vmatmul.f32.gmra.mxu0 %v307
        %v532 = vpop.f32.mrf.mxu0
        %v533 = vadd.f32 0.0, %v532
        %534 = vmatmul.f32.gmra.mxu0 %v310
        %v535 = vpop.f32.mrf.mxu0
        %v536 = vadd.f32 0.0, %v535
        %537 = vmatmul.f32.gmra.mxu0 %v313
        %v538 = vpop.f32.mrf.mxu0
        %v539 = vadd.f32 0.0, %v538
        %540 = vmatmul.f32.gmra.mxu0 %v316
        %v541 = vpop.f32.mrf.mxu0
        %v542 = vadd.f32 0.0, %v541
        %543 = vmatmul.f32.gmra.mxu0 %v319
        %v544 = vpop.f32.mrf.mxu0
        %v545 = vadd.f32 0.0, %v544
        %546 = vmatmul.f32.gmra.mxu0 %v322
        %v547 = vpop.f32.mrf.mxu0
        %v548 = vadd.f32 0.0, %v547
        %549 = vmatmul.f32.gmra.mxu0 %v325
        %v550 = vpop.f32.mrf.mxu0
        %v551 = vadd.f32 0.0, %v550
        %552 = vmatmul.f32.gmra.mxu0 %v328
        %v553 = vpop.f32.mrf.mxu0
        %v554 = vadd.f32 0.0, %v553
        %555 = vmatmul.f32.gmra.mxu0 %v331
        %v556 = vpop.f32.mrf.mxu0
        %v557 = vadd.f32 0.0, %v556
        %558 = vmatmul.f32.gmra.mxu0 %v334
        %v559 = vpop.f32.mrf.mxu0
        %v560 = vadd.f32 0.0, %v559
        %561 = vmatmul.f32.gmra.mxu0 %v337
        %v562 = vpop.f32.mrf.mxu0
        %v563 = vadd.f32 0.0, %v562
        %564 = vmatmul.f32.gmra.mxu0 %v340
        %v565 = vpop.f32.mrf.mxu0
        %v566 = vadd.f32 0.0, %v565
        %567 = vmatmul.f32.gmra.mxu0 %v343
        %v568 = vpop.f32.mrf.mxu0
        %v569 = vadd.f32 0.0, %v568
        %570 = vmatmul.f32.gmra.mxu0 %v346
        %v571 = vpop.f32.mrf.mxu0
        %v572 = vadd.f32 0.0, %v571
        %573 = vmatmul.f32.gmra.mxu0 %v349
        %v574 = vpop.f32.mrf.mxu0
        %v575 = vadd.f32 0.0, %v574
        %576 = vmatmul.f32.gmra.mxu0 %v352
        %v577 = vpop.f32.mrf.mxu0
        %v578 = vadd.f32 0.0, %v577
        %579 = vmatmul.f32.gmra.mxu0 %v355
        %v580 = vpop.f32.mrf.mxu0
        %v581 = vadd.f32 0.0, %v580
        %582 = vdwg.mxu0
        %v583 = vld [vmem:[%s2] sm:$0x3]
        %v585 = vperm.slane %v583, 0
        %v586 = vperm.slane %v583, 1
        %v589 = vsub.f32 %v375, %v585
        %v590 = vsub.f32 %v488, %v586
        %v591 = vsub.f32 %v378, %v585
        %v592 = vsub.f32 %v491, %v586
        %v593 = vsub.f32 %v381, %v585
        %v594 = vsub.f32 %v494, %v586
        %v595 = vsub.f32 %v384, %v585
        %v596 = vsub.f32 %v497, %v586
        %v597 = vsub.f32 %v387, %v585
        %v598 = vsub.f32 %v500, %v586
        %v599 = vsub.f32 %v390, %v585
        %v600 = vsub.f32 %v503, %v586
        %v601 = vsub.f32 %v393, %v585
        %v602 = vsub.f32 %v506, %v586
        %v603 = vsub.f32 %v396, %v585
        %v604 = vsub.f32 %v509, %v586
        %v605 = vsub.f32 %v399, %v585
        %v606 = vsub.f32 %v512, %v586
        %v607 = vsub.f32 %v402, %v585
        %v608 = vsub.f32 %v515, %v586
        %v609 = vsub.f32 %v405, %v585
        %v610 = vsub.f32 %v518, %v586
        %v611 = vsub.f32 %v408, %v585
        %v612 = vsub.f32 %v521, %v586
        %v613 = vsub.f32 %v411, %v585
        %v614 = vsub.f32 %v524, %v586
        %v615 = vsub.f32 %v414, %v585
        %v616 = vsub.f32 %v527, %v586
        %v617 = vsub.f32 %v417, %v585
        %v618 = vsub.f32 %v530, %v586
        %v619 = vsub.f32 %v420, %v585
        %v620 = vsub.f32 %v533, %v586
        %v621 = vsub.f32 %v423, %v585
        %v622 = vsub.f32 %v536, %v586
        %v623 = vsub.f32 %v426, %v585
        %v624 = vsub.f32 %v539, %v586
        %v625 = vsub.f32 %v429, %v585
        %v626 = vsub.f32 %v542, %v586
        %v627 = vsub.f32 %v432, %v585
        %v628 = vsub.f32 %v545, %v586
        %v629 = vsub.f32 %v435, %v585
        %v630 = vsub.f32 %v548, %v586
        %v631 = vsub.f32 %v438, %v585
        %v632 = vsub.f32 %v551, %v586
        %v633 = vsub.f32 %v441, %v585
        %v634 = vsub.f32 %v554, %v586
        %v635 = vsub.f32 %v444, %v585
        %v636 = vsub.f32 %v557, %v586
        %v637 = vsub.f32 %v447, %v585
        %v638 = vsub.f32 %v560, %v586
        %v639 = vsub.f32 %v450, %v585
        %v640 = vsub.f32 %v563, %v586
        %v641 = vsub.f32 %v453, %v585
        %v642 = vsub.f32 %v566, %v586
        %v643 = vsub.f32 %v456, %v585
        %v644 = vsub.f32 %v569, %v586
        %v645 = vsub.f32 %v459, %v585
        %v646 = vsub.f32 %v572, %v586
        %v647 = vsub.f32 %v462, %v585
        %v648 = vsub.f32 %v575, %v586
        %v649 = vsub.f32 %v465, %v585
        %v650 = vsub.f32 %v578, %v586
        %v651 = vsub.f32 %v468, %v585
        %v652 = vsub.f32 %v581, %v586
        %v653 = vmul.f32 %v589, %v589
        %v654 = vmul.f32 %v590, %v590
        %v655 = vmul.f32 %v591, %v591
        %v656 = vmul.f32 %v592, %v592
        %v657 = vmul.f32 %v593, %v593
        %v658 = vmul.f32 %v594, %v594
        %v659 = vmul.f32 %v595, %v595
        %v660 = vmul.f32 %v596, %v596
        %v661 = vmul.f32 %v597, %v597
        %v662 = vmul.f32 %v598, %v598
        %v663 = vmul.f32 %v599, %v599
        %v664 = vmul.f32 %v600, %v600
        %v665 = vmul.f32 %v601, %v601
        %v666 = vmul.f32 %v602, %v602
        %v667 = vmul.f32 %v603, %v603
        %v668 = vmul.f32 %v604, %v604
        %v669 = vmul.f32 %v605, %v605
        %v670 = vmul.f32 %v606, %v606
        %v671 = vmul.f32 %v607, %v607
        %v672 = vmul.f32 %v608, %v608
        %v673 = vmul.f32 %v609, %v609
        %v674 = vmul.f32 %v610, %v610
        %v675 = vmul.f32 %v611, %v611
        %v676 = vmul.f32 %v612, %v612
        %v677 = vmul.f32 %v613, %v613
        %v678 = vmul.f32 %v614, %v614
        %v679 = vmul.f32 %v615, %v615
        %v680 = vmul.f32 %v616, %v616
        %v681 = vmul.f32 %v617, %v617
        %v682 = vmul.f32 %v618, %v618
        %v683 = vmul.f32 %v619, %v619
        %v684 = vmul.f32 %v620, %v620
        %v685 = vmul.f32 %v621, %v621
        %v686 = vmul.f32 %v622, %v622
        %v687 = vmul.f32 %v623, %v623
        %v688 = vmul.f32 %v624, %v624
        %v689 = vmul.f32 %v625, %v625
        %v690 = vmul.f32 %v626, %v626
        %v691 = vmul.f32 %v627, %v627
        %v692 = vmul.f32 %v628, %v628
        %v693 = vmul.f32 %v629, %v629
        %v694 = vmul.f32 %v630, %v630
        %v695 = vmul.f32 %v631, %v631
        %v696 = vmul.f32 %v632, %v632
        %v697 = vmul.f32 %v633, %v633
        %v698 = vmul.f32 %v634, %v634
        %v699 = vmul.f32 %v635, %v635
        %v700 = vmul.f32 %v636, %v636
        %v701 = vmul.f32 %v637, %v637
        %v702 = vmul.f32 %v638, %v638
        %v703 = vmul.f32 %v639, %v639
        %v704 = vmul.f32 %v640, %v640
        %v705 = vmul.f32 %v641, %v641
        %v706 = vmul.f32 %v642, %v642
        %v707 = vmul.f32 %v643, %v643
        %v708 = vmul.f32 %v644, %v644
        %v709 = vmul.f32 %v645, %v645
        %v710 = vmul.f32 %v646, %v646
        %v711 = vmul.f32 %v647, %v647
        %v712 = vmul.f32 %v648, %v648
        %v713 = vmul.f32 %v649, %v649
        %v714 = vmul.f32 %v650, %v650
        %v715 = vmul.f32 %v651, %v651
        %v716 = vmul.f32 %v652, %v652
        %v717 = vsub.f32 0.0, %v653
        %v718 = vsub.f32 0.0, %v654
        %v719 = vsub.f32 0.0, %v655
        %v720 = vsub.f32 0.0, %v656
        %v721 = vsub.f32 0.0, %v657
        %v722 = vsub.f32 0.0, %v658
        %v723 = vsub.f32 0.0, %v659
        %v724 = vsub.f32 0.0, %v660
        %v725 = vsub.f32 0.0, %v661
        %v726 = vsub.f32 0.0, %v662
        %v727 = vsub.f32 0.0, %v663
        %v728 = vsub.f32 0.0, %v664
        %v729 = vsub.f32 0.0, %v665
        %v730 = vsub.f32 0.0, %v666
        %v731 = vsub.f32 0.0, %v667
        %v732 = vsub.f32 0.0, %v668
        %v733 = vsub.f32 0.0, %v669
        %v734 = vsub.f32 0.0, %v670
        %v735 = vsub.f32 0.0, %v671
        %v736 = vsub.f32 0.0, %v672
        %v737 = vsub.f32 0.0, %v673
        %v738 = vsub.f32 0.0, %v674
        %v739 = vsub.f32 0.0, %v675
        %v740 = vsub.f32 0.0, %v676
        %v741 = vsub.f32 0.0, %v677
        %v742 = vsub.f32 0.0, %v678
        %v743 = vsub.f32 0.0, %v679
        %v744 = vsub.f32 0.0, %v680
        %v745 = vsub.f32 0.0, %v681
        %v746 = vsub.f32 0.0, %v682
        %v747 = vsub.f32 0.0, %v683
        %v748 = vsub.f32 0.0, %v684
        %v749 = vsub.f32 0.0, %v685
        %v750 = vsub.f32 0.0, %v686
        %v751 = vsub.f32 0.0, %v687
        %v752 = vsub.f32 0.0, %v688
        %v753 = vsub.f32 0.0, %v689
        %v754 = vsub.f32 0.0, %v690
        %v755 = vsub.f32 0.0, %v691
        %v756 = vsub.f32 0.0, %v692
        %v757 = vsub.f32 0.0, %v693
        %v758 = vsub.f32 0.0, %v694
        %v759 = vsub.f32 0.0, %v695
        %v760 = vsub.f32 0.0, %v696
        %v761 = vsub.f32 0.0, %v697
        %v762 = vsub.f32 0.0, %v698
        %v763 = vsub.f32 0.0, %v699
        %v764 = vsub.f32 0.0, %v700
        %v765 = vsub.f32 0.0, %v701
        %v766 = vsub.f32 0.0, %v702
        %v767 = vsub.f32 0.0, %v703
        %v768 = vsub.f32 0.0, %v704
        %v769 = vsub.f32 0.0, %v705
        %v770 = vsub.f32 0.0, %v706
        %v771 = vsub.f32 0.0, %v707
        %v772 = vsub.f32 0.0, %v708
        %v773 = vsub.f32 0.0, %v709
        %v774 = vsub.f32 0.0, %v710
        %v775 = vsub.f32 0.0, %v711
        %v776 = vsub.f32 0.0, %v712
        %v777 = vsub.f32 0.0, %v713
        %v778 = vsub.f32 0.0, %v714
        %v779 = vsub.f32 0.0, %v715
        %v780 = vsub.f32 0.0, %v716
        %v781 = vmul.f32 %v717, 1.442695
        %v782 = vpow.pop %v781
        %v783 = vmul.f32 %v718, 1.442695
        %v784 = vpow.pop %v783
        %v785 = vmul.f32 %v719, 1.442695
        %v786 = vpow.pop %v785
        %v787 = vmul.f32 %v720, 1.442695
        %v788 = vpow.pop %v787
        %v789 = vmul.f32 %v721, 1.442695
        %v790 = vpow.pop %v789
        %v791 = vmul.f32 %v722, 1.442695
        %v792 = vpow.pop %v791
        %v793 = vmul.f32 %v723, 1.442695
        %v794 = vpow.pop %v793
        %v795 = vmul.f32 %v724, 1.442695
        %v796 = vpow.pop %v795
        %v797 = vmul.f32 %v725, 1.442695
        %v798 = vpow.pop %v797
        %v799 = vmul.f32 %v726, 1.442695
        %v800 = vpow.pop %v799
        %v801 = vmul.f32 %v727, 1.442695
        %v802 = vpow.pop %v801
        %v803 = vmul.f32 %v728, 1.442695
        %v804 = vpow.pop %v803
        %v805 = vmul.f32 %v729, 1.442695
        %v806 = vpow.pop %v805
        %v807 = vmul.f32 %v730, 1.442695
        %v808 = vpow.pop %v807
        %v809 = vmul.f32 %v731, 1.442695
        %v810 = vpow.pop %v809
        %v811 = vmul.f32 %v732, 1.442695
        %v812 = vpow.pop %v811
        %v813 = vmul.f32 %v733, 1.442695
        %v814 = vpow.pop %v813
        %v815 = vmul.f32 %v734, 1.442695
        %v816 = vpow.pop %v815
        %v817 = vmul.f32 %v735, 1.442695
        %v818 = vpow.pop %v817
        %v819 = vmul.f32 %v736, 1.442695
        %v820 = vpow.pop %v819
        %v821 = vmul.f32 %v737, 1.442695
        %v822 = vpow.pop %v821
        %v823 = vmul.f32 %v738, 1.442695
        %v824 = vpow.pop %v823
        %v825 = vmul.f32 %v739, 1.442695
        %v826 = vpow.pop %v825
        %v827 = vmul.f32 %v740, 1.442695
        %v828 = vpow.pop %v827
        %v829 = vmul.f32 %v741, 1.442695
        %v830 = vpow.pop %v829
        %v831 = vmul.f32 %v742, 1.442695
        %v832 = vpow.pop %v831
        %v833 = vmul.f32 %v743, 1.442695
        %v834 = vpow.pop %v833
        %v835 = vmul.f32 %v744, 1.442695
        %v836 = vpow.pop %v835
        %v837 = vmul.f32 %v745, 1.442695
        %v838 = vpow.pop %v837
        %v839 = vmul.f32 %v746, 1.442695
        %v840 = vpow.pop %v839
        %v841 = vmul.f32 %v747, 1.442695
        %v842 = vpow.pop %v841
        %v843 = vmul.f32 %v748, 1.442695
        %v844 = vpow.pop %v843
        %v845 = vmul.f32 %v749, 1.442695
        %v846 = vpow.pop %v845
        %v847 = vmul.f32 %v750, 1.442695
        %v848 = vpow.pop %v847
        %v849 = vmul.f32 %v751, 1.442695
        %v850 = vpow.pop %v849
        %v851 = vmul.f32 %v752, 1.442695
        %v852 = vpow.pop %v851
        %v853 = vmul.f32 %v753, 1.442695
        %v854 = vpow.pop %v853
        %v855 = vmul.f32 %v754, 1.442695
        %v856 = vpow.pop %v855
        %v857 = vmul.f32 %v755, 1.442695
        %v858 = vpow.pop %v857
        %v859 = vmul.f32 %v756, 1.442695
        %v860 = vpow.pop %v859
        %v861 = vmul.f32 %v757, 1.442695
        %v862 = vpow.pop %v861
        %v863 = vmul.f32 %v758, 1.442695
        %v864 = vpow.pop %v863
        %v865 = vmul.f32 %v759, 1.442695
        %v866 = vpow.pop %v865
        %v867 = vmul.f32 %v760, 1.442695
        %v868 = vpow.pop %v867
        %v869 = vmul.f32 %v761, 1.442695
        %v870 = vpow.pop %v869
        %v871 = vmul.f32 %v762, 1.442695
        %v872 = vpow.pop %v871
        %v873 = vmul.f32 %v763, 1.442695
        %v874 = vpow.pop %v873
        %v875 = vmul.f32 %v764, 1.442695
        %v876 = vpow.pop %v875
        %v877 = vmul.f32 %v765, 1.442695
        %v878 = vpow.pop %v877
        %v879 = vmul.f32 %v766, 1.442695
        %v880 = vpow.pop %v879
        %v881 = vmul.f32 %v767, 1.442695
        %v882 = vpow.pop %v881
        %v883 = vmul.f32 %v768, 1.442695
        %v884 = vpow.pop %v883
        %v885 = vmul.f32 %v769, 1.442695
        %v886 = vpow.pop %v885
        %v887 = vmul.f32 %v770, 1.442695
        %v888 = vpow.pop %v887
        %v889 = vmul.f32 %v771, 1.442695
        %v890 = vpow.pop %v889
        %v891 = vmul.f32 %v772, 1.442695
        %v892 = vpow.pop %v891
        %v893 = vmul.f32 %v773, 1.442695
        %v894 = vpow.pop %v893
        %v895 = vmul.f32 %v774, 1.442695
        %v896 = vpow.pop %v895
        %v897 = vmul.f32 %v775, 1.442695
        %v898 = vpow.pop %v897
        %v899 = vmul.f32 %v776, 1.442695
        %v900 = vpow.pop %v899
        %v901 = vmul.f32 %v777, 1.442695
        %v902 = vpow.pop %v901
        %v903 = vmul.f32 %v778, 1.442695
        %v904 = vpow.pop %v903
        %v905 = vmul.f32 %v779, 1.442695
        %v906 = vpow.pop %v905
        %v907 = vmul.f32 %v780, 1.442695
        %v908 = vpow.pop %v907
        %v909 = vld [vmem:[%s3] sm:$0xff]
        %v910 = vld [vmem:[%s3 + $0x8] sm:$0xff]
        %v911 = vld [vmem:[%s3 + $0x10] sm:$0xff]
        %v912 = vld [vmem:[%s3 + $0x18] sm:$0xff]
        %v913 = vld [vmem:[%s3 + $0x20] sm:$0xff]
        %v914 = vld [vmem:[%s3 + $0x28] sm:$0xff]
        %v915 = vld [vmem:[%s3 + $0x30] sm:$0xff]
        %v916 = vld [vmem:[%s3 + $0x38] sm:$0xff]
        %v917 = vld [vmem:[%s3 + $0x40] sm:$0xff]
        %v918 = vld [vmem:[%s3 + $0x48] sm:$0xff]
        %v919 = vld [vmem:[%s3 + $0x50] sm:$0xff]
        %v920 = vld [vmem:[%s3 + $0x58] sm:$0xff]
        %v921 = vld [vmem:[%s3 + $0x60] sm:$0xff]
        %v922 = vld [vmem:[%s3 + $0x68] sm:$0xff]
        %v923 = vld [vmem:[%s3 + $0x70] sm:$0xff]
        %v924 = vld [vmem:[%s3 + $0x78] sm:$0xff]
        %v925 = vld [vmem:[%s3 + $0x80] sm:$0xff]
        %v926 = vld [vmem:[%s3 + $0x88] sm:$0xff]
        %v927 = vld [vmem:[%s4] sm:$0x1]
        %v929 = vperm.slane %v927, 0
        %vm931 = vcmask 130048
        %v933 = vsel %vm931, %v784, 0
        %v936 = vsel %vm931, %v788, 0
        %v939 = vsel %vm931, %v792, 0
        %v942 = vsel %vm931, %v796, 0
        %v945 = vsel %vm931, %v800, 0
        %v948 = vsel %vm931, %v804, 0
        %v951 = vsel %vm931, %v808, 0
        %v954 = vsel %vm931, %v812, 0
        %v957 = vsel %vm931, %v816, 0
        %v960 = vsel %vm931, %v820, 0
        %v963 = vsel %vm931, %v824, 0
        %v966 = vsel %vm931, %v828, 0
        %v969 = vsel %vm931, %v832, 0
        %v972 = vsel %vm931, %v836, 0
        %v975 = vsel %vm931, %v840, 0
        %v978 = vsel %vm931, %v844, 0
        %v981 = vsel %vm931, %v848, 0
        %v984 = vsel %vm931, %v852, 0
        %v987 = vsel %vm931, %v856, 0
        %v990 = vsel %vm931, %v860, 0
        %v993 = vsel %vm931, %v864, 0
        %v996 = vsel %vm931, %v868, 0
        %v999 = vsel %vm931, %v872, 0
        %v1002 = vsel %vm931, %v876, 0
        %v1005 = vsel %vm931, %v880, 0
        %v1008 = vsel %vm931, %v884, 0
        %v1011 = vsel %vm931, %v888, 0
        %v1014 = vsel %vm931, %v892, 0
        %v1017 = vsel %vm931, %v896, 0
        %v1020 = vsel %vm931, %v900, 0
        %v1023 = vsel %vm931, %v904, 0
        %v1026 = vsel %vm931, %v908, 0
        %1028 = vmatpush.msra.mxu0 %v924
        %1029 = vmatpush.msra.mxu0 %v923
        %1030 = vmatpush.msra.mxu0 %v922
        %1031 = vmatpush.msra.mxu0 %v921
        %1032 = vmatpush.msra.mxu0 %v920
        %1033 = vmatpush.msra.mxu0 %v919
        %1034 = vmatpush.msra.mxu0 %v918
        %1035 = vmatpush.msra.mxu0 %v917
        %1036 = vmatpush.msra.mxu0 %v916
        %1037 = vmatpush.msra.mxu0 %v915
        %1038 = vmatpush.msra.mxu0 %v914
        %1039 = vmatpush.msra.mxu0 %v913
        %1040 = vmatpush.msra.mxu0 %v912
        %1041 = vmatpush.msra.mxu0 %v911
        %1042 = vmatpush.msra.mxu0 %v910
        %1043 = vmatpush.msra.mxu0 %v909
        %1044 = vmatmul.f32.gmra.mxu0 %v782
        %v1045 = vpop.f32.mrf.mxu0
        %v1046 = vadd.f32 %v929, %v1045
        %1047 = vmatmul.f32.gmra.mxu0 %v786
        %v1048 = vpop.f32.mrf.mxu0
        %v1049 = vadd.f32 %v929, %v1048
        %1050 = vmatmul.f32.gmra.mxu0 %v790
        %v1051 = vpop.f32.mrf.mxu0
        %v1052 = vadd.f32 %v929, %v1051
        %1053 = vmatmul.f32.gmra.mxu0 %v794
        %v1054 = vpop.f32.mrf.mxu0
        %v1055 = vadd.f32 %v929, %v1054
        %1056 = vmatmul.f32.gmra.mxu0 %v798
        %v1057 = vpop.f32.mrf.mxu0
        %v1058 = vadd.f32 %v929, %v1057
        %1059 = vmatmul.f32.gmra.mxu0 %v802
        %v1060 = vpop.f32.mrf.mxu0
        %v1061 = vadd.f32 %v929, %v1060
        %1062 = vmatmul.f32.gmra.mxu0 %v806
        %v1063 = vpop.f32.mrf.mxu0
        %v1064 = vadd.f32 %v929, %v1063
        %1065 = vmatmul.f32.gmra.mxu0 %v810
        %v1066 = vpop.f32.mrf.mxu0
        %v1067 = vadd.f32 %v929, %v1066
        %1068 = vmatmul.f32.gmra.mxu0 %v814
        %v1069 = vpop.f32.mrf.mxu0
        %v1070 = vadd.f32 %v929, %v1069
        %1071 = vmatmul.f32.gmra.mxu0 %v818
        %v1072 = vpop.f32.mrf.mxu0
        %v1073 = vadd.f32 %v929, %v1072
        %1074 = vmatmul.f32.gmra.mxu0 %v822
        %v1075 = vpop.f32.mrf.mxu0
        %v1076 = vadd.f32 %v929, %v1075
        %1077 = vmatmul.f32.gmra.mxu0 %v826
        %v1078 = vpop.f32.mrf.mxu0
        %v1079 = vadd.f32 %v929, %v1078
        %1080 = vmatmul.f32.gmra.mxu0 %v830
        %v1081 = vpop.f32.mrf.mxu0
        %v1082 = vadd.f32 %v929, %v1081
        %1083 = vmatmul.f32.gmra.mxu0 %v834
        %v1084 = vpop.f32.mrf.mxu0
        %v1085 = vadd.f32 %v929, %v1084
        %1086 = vmatmul.f32.gmra.mxu0 %v838
        %v1087 = vpop.f32.mrf.mxu0
        %v1088 = vadd.f32 %v929, %v1087
        %1089 = vmatmul.f32.gmra.mxu0 %v842
        %v1090 = vpop.f32.mrf.mxu0
        %v1091 = vadd.f32 %v929, %v1090
        %1092 = vmatmul.f32.gmra.mxu0 %v846
        %v1093 = vpop.f32.mrf.mxu0
        %v1094 = vadd.f32 %v929, %v1093
        %1095 = vmatmul.f32.gmra.mxu0 %v850
        %v1096 = vpop.f32.mrf.mxu0
        %v1097 = vadd.f32 %v929, %v1096
        %1098 = vmatmul.f32.gmra.mxu0 %v854
        %v1099 = vpop.f32.mrf.mxu0
        %v1100 = vadd.f32 %v929, %v1099
        %1101 = vmatmul.f32.gmra.mxu0 %v858
        %v1102 = vpop.f32.mrf.mxu0
        %v1103 = vadd.f32 %v929, %v1102
        %1104 = vmatmul.f32.gmra.mxu0 %v862
        %v1105 = vpop.f32.mrf.mxu0
        %v1106 = vadd.f32 %v929, %v1105
        %1107 = vmatmul.f32.gmra.mxu0 %v866
        %v1108 = vpop.f32.mrf.mxu0
        %v1109 = vadd.f32 %v929, %v1108
        %1110 = vmatmul.f32.gmra.mxu0 %v870
        %v1111 = vpop.f32.mrf.mxu0
        %v1112 = vadd.f32 %v929, %v1111
        %1113 = vmatmul.f32.gmra.mxu0 %v874
        %v1114 = vpop.f32.mrf.mxu0
        %v1115 = vadd.f32 %v929, %v1114
        %1116 = vmatmul.f32.gmra.mxu0 %v878
        %v1117 = vpop.f32.mrf.mxu0
        %v1118 = vadd.f32 %v929, %v1117
        %1119 = vmatmul.f32.gmra.mxu0 %v882
        %v1120 = vpop.f32.mrf.mxu0
        %v1121 = vadd.f32 %v929, %v1120
        %1122 = vmatmul.f32.gmra.mxu0 %v886
        %v1123 = vpop.f32.mrf.mxu0
        %v1124 = vadd.f32 %v929, %v1123
        %1125 = vmatmul.f32.gmra.mxu0 %v890
        %v1126 = vpop.f32.mrf.mxu0
        %v1127 = vadd.f32 %v929, %v1126
        %1128 = vmatmul.f32.gmra.mxu0 %v894
        %v1129 = vpop.f32.mrf.mxu0
        %v1130 = vadd.f32 %v929, %v1129
        %1131 = vmatmul.f32.gmra.mxu0 %v898
        %v1132 = vpop.f32.mrf.mxu0
        %v1133 = vadd.f32 %v929, %v1132
        %1134 = vmatmul.f32.gmra.mxu0 %v902
        %v1135 = vpop.f32.mrf.mxu0
        %v1136 = vadd.f32 %v929, %v1135
        %1137 = vmatmul.f32.gmra.mxu0 %v906
        %v1138 = vpop.f32.mrf.mxu0
        %v1139 = vadd.f32 %v929, %v1138
        %1140 = vdwg.mxu0
        %1141 = vmatpush.msra.mxu0 0.0
        %1142 = vmatpush.msra.mxu0 0.0
        %1143 = vmatpush.msra.mxu0 0.0
        %1144 = vmatpush.msra.mxu0 0.0
        %1145 = vmatpush.msra.mxu0 0.0
        %1146 = vmatpush.msra.mxu0 0.0
        %1147 = vmatpush.msra.mxu0 0.0
        %1148 = vmatpush.msra.mxu0 0.0
        %1149 = vmatpush.msra.mxu0 0.0
        %1150 = vmatpush.msra.mxu0 0.0
        %1151 = vmatpush.msra.mxu0 0.0
        %1152 = vmatpush.msra.mxu0 0.0
        %1153 = vmatpush.msra.mxu0 0.0
        %1154 = vmatpush.msra.mxu0 0.0
        %1155 = vmatpush.msra.mxu0 %v926
        %1156 = vmatpush.msra.mxu0 %v925
        %1157 = vmatmul.f32.gmra.mxu0 %v933
        %v1158 = vpop.f32.mrf.mxu0
        %v1159 = vadd.f32 %v1046, %v1158
        %1160 = vmatmul.f32.gmra.mxu0 %v936
        %v1161 = vpop.f32.mrf.mxu0
        %v1162 = vadd.f32 %v1049, %v1161
        %1163 = vmatmul.f32.gmra.mxu0 %v939
        %v1164 = vpop.f32.mrf.mxu0
        %v1165 = vadd.f32 %v1052, %v1164
        %1166 = vmatmul.f32.gmra.mxu0 %v942
        %v1167 = vpop.f32.mrf.mxu0
        %v1168 = vadd.f32 %v1055, %v1167
        %1169 = vmatmul.f32.gmra.mxu0 %v945
        %v1170 = vpop.f32.mrf.mxu0
        %v1171 = vadd.f32 %v1058, %v1170
        %1172 = vmatmul.f32.gmra.mxu0 %v948
        %v1173 = vpop.f32.mrf.mxu0
        %v1174 = vadd.f32 %v1061, %v1173
        %1175 = vmatmul.f32.gmra.mxu0 %v951
        %v1176 = vpop.f32.mrf.mxu0
        %v1177 = vadd.f32 %v1064, %v1176
        %1178 = vmatmul.f32.gmra.mxu0 %v954
        %v1179 = vpop.f32.mrf.mxu0
        %v1180 = vadd.f32 %v1067, %v1179
        %1181 = vmatmul.f32.gmra.mxu0 %v957
        %v1182 = vpop.f32.mrf.mxu0
        %v1183 = vadd.f32 %v1070, %v1182
        %1184 = vmatmul.f32.gmra.mxu0 %v960
        %v1185 = vpop.f32.mrf.mxu0
        %v1186 = vadd.f32 %v1073, %v1185
        %1187 = vmatmul.f32.gmra.mxu0 %v963
        %v1188 = vpop.f32.mrf.mxu0
        %v1189 = vadd.f32 %v1076, %v1188
        %1190 = vmatmul.f32.gmra.mxu0 %v966
        %v1191 = vpop.f32.mrf.mxu0
        %v1192 = vadd.f32 %v1079, %v1191
        %1193 = vmatmul.f32.gmra.mxu0 %v969
        %v1194 = vpop.f32.mrf.mxu0
        %v1195 = vadd.f32 %v1082, %v1194
        %1196 = vmatmul.f32.gmra.mxu0 %v972
        %v1197 = vpop.f32.mrf.mxu0
        %v1198 = vadd.f32 %v1085, %v1197
        %1199 = vmatmul.f32.gmra.mxu0 %v975
        %v1200 = vpop.f32.mrf.mxu0
        %v1201 = vadd.f32 %v1088, %v1200
        %1202 = vmatmul.f32.gmra.mxu0 %v978
        %v1203 = vpop.f32.mrf.mxu0
        %v1204 = vadd.f32 %v1091, %v1203
        %1205 = vmatmul.f32.gmra.mxu0 %v981
        %v1206 = vpop.f32.mrf.mxu0
        %v1207 = vadd.f32 %v1094, %v1206
        %1208 = vmatmul.f32.gmra.mxu0 %v984
        %v1209 = vpop.f32.mrf.mxu0
        %v1210 = vadd.f32 %v1097, %v1209
        %1211 = vmatmul.f32.gmra.mxu0 %v987
        %v1212 = vpop.f32.mrf.mxu0
        %v1213 = vadd.f32 %v1100, %v1212
        %1214 = vmatmul.f32.gmra.mxu0 %v990
        %v1215 = vpop.f32.mrf.mxu0
        %v1216 = vadd.f32 %v1103, %v1215
        %1217 = vmatmul.f32.gmra.mxu0 %v993
        %v1218 = vpop.f32.mrf.mxu0
        %v1219 = vadd.f32 %v1106, %v1218
        %1220 = vmatmul.f32.gmra.mxu0 %v996
        %v1221 = vpop.f32.mrf.mxu0
        %v1222 = vadd.f32 %v1109, %v1221
        %1223 = vmatmul.f32.gmra.mxu0 %v999
        %v1224 = vpop.f32.mrf.mxu0
        %v1225 = vadd.f32 %v1112, %v1224
        %1226 = vmatmul.f32.gmra.mxu0 %v1002
        %v1227 = vpop.f32.mrf.mxu0
        %v1228 = vadd.f32 %v1115, %v1227
        %1229 = vmatmul.f32.gmra.mxu0 %v1005
        %v1230 = vpop.f32.mrf.mxu0
        %v1231 = vadd.f32 %v1118, %v1230
        %1232 = vmatmul.f32.gmra.mxu0 %v1008
        %v1233 = vpop.f32.mrf.mxu0
        %v1234 = vadd.f32 %v1121, %v1233
        %1235 = vmatmul.f32.gmra.mxu0 %v1011
        %v1236 = vpop.f32.mrf.mxu0
        %v1237 = vadd.f32 %v1124, %v1236
        %1238 = vmatmul.f32.gmra.mxu0 %v1014
        %v1239 = vpop.f32.mrf.mxu0
        %v1240 = vadd.f32 %v1127, %v1239
        %1241 = vmatmul.f32.gmra.mxu0 %v1017
        %v1242 = vpop.f32.mrf.mxu0
        %v1243 = vadd.f32 %v1130, %v1242
        %1244 = vmatmul.f32.gmra.mxu0 %v1020
        %v1245 = vpop.f32.mrf.mxu0
        %v1246 = vadd.f32 %v1133, %v1245
        %1247 = vmatmul.f32.gmra.mxu0 %v1023
        %v1248 = vpop.f32.mrf.mxu0
        %v1249 = vadd.f32 %v1136, %v1248
        %1250 = vmatmul.f32.gmra.mxu0 %v1026
        %v1251 = vpop.f32.mrf.mxu0
        %v1252 = vadd.f32 %v1139, %v1251
        %1253 = vdwg.mxu0
        %1254 = vst [vmem:[%s218] sm:$0xff] %v1159
        %1255 = vst [vmem:[%s218 + $0x8] sm:$0xff] %v1162
        %1256 = vst [vmem:[%s218 + $0x10] sm:$0xff] %v1165
        %1257 = vst [vmem:[%s218 + $0x18] sm:$0xff] %v1168
        %1258 = vst [vmem:[%s218 + $0x20] sm:$0xff] %v1171
        %1259 = vst [vmem:[%s218 + $0x28] sm:$0xff] %v1174
        %1260 = vst [vmem:[%s218 + $0x30] sm:$0xff] %v1177
        %1261 = vst [vmem:[%s218 + $0x38] sm:$0xff] %v1180
        %1262 = vst [vmem:[%s218 + $0x40] sm:$0xff] %v1183
        %1263 = vst [vmem:[%s218 + $0x48] sm:$0xff] %v1186
        %1264 = vst [vmem:[%s218 + $0x50] sm:$0xff] %v1189
        %1265 = vst [vmem:[%s218 + $0x58] sm:$0xff] %v1192
        %1266 = vst [vmem:[%s218 + $0x60] sm:$0xff] %v1195
        %1267 = vst [vmem:[%s218 + $0x68] sm:$0xff] %v1198
        %1268 = vst [vmem:[%s218 + $0x70] sm:$0xff] %v1201
        %1269 = vst [vmem:[%s218 + $0x78] sm:$0xff] %v1204
        %1270 = vst [vmem:[%s218 + $0x80] sm:$0xff] %v1207
        %1271 = vst [vmem:[%s218 + $0x88] sm:$0xff] %v1210
        %1272 = vst [vmem:[%s218 + $0x90] sm:$0xff] %v1213
        %1273 = vst [vmem:[%s218 + $0x98] sm:$0xff] %v1216
        %1274 = vst [vmem:[%s218 + $0xa0] sm:$0xff] %v1219
        %1275 = vst [vmem:[%s218 + $0xa8] sm:$0xff] %v1222
        %1276 = vst [vmem:[%s218 + $0xb0] sm:$0xff] %v1225
        %1277 = vst [vmem:[%s218 + $0xb8] sm:$0xff] %v1228
        %1278 = vst [vmem:[%s218 + $0xc0] sm:$0xff] %v1231
        %1279 = vst [vmem:[%s218 + $0xc8] sm:$0xff] %v1234
        %1280 = vst [vmem:[%s218 + $0xd0] sm:$0xff] %v1237
        %1281 = vst [vmem:[%s218 + $0xd8] sm:$0xff] %v1240
        %1282 = vst [vmem:[%s218 + $0xe0] sm:$0xff] %v1243
        %1283 = vst [vmem:[%s218 + $0xe8] sm:$0xff] %v1246
        %1284 = vst [vmem:[%s218 + $0xf0] sm:$0xff] %v1249
        %1285 = vst [vmem:[%s218 + $0xf8] sm:$0xff] %v1252
        %s1286 = sand.u32 %s137, 1
        %s1287 = scalar_lea.sflag [#allocation3], %s1286
        %s1288 = sand.u32 %s137, 1
        %s1289 = smul.addr %s1288, 256
        %s1290 = scalar_lea.vmem [#allocation2], %s1289
        // Predicated region
        $region41: #{tpu_custom_call.1} parent=39 // pred_check
          %p1291 = pneg %p147
        $region42: #{tpu_custom_call.1} parent=39 // pred_check_branch
          %1293 = sbr.rel (%p1291) target = $region44
        $region43: #{tpu_custom_call.1} parent=39 // pred_region
          %s1294 = smul.u32 32, %s19
          %1296 = vsyncadd %s1287, 0
          %s1297 = smul.addr %s1294, 8
          %s1298 = scalar_lea.hbm %s5, %s1297
          %s1299 = sshll.u32 %s1290, 4
          %s1300 = int_to_ptr.vmem [resolvable:$true] %s1299
          %s1301 = sshll.u32 %s1298, 4
          %s1302 = int_to_ptr.hbm [resolvable:$true] %s1301
          %1307 = dma.vmem_to_hbm [thread:$0]  %s1300, 4096, %s1302, %s1287, 128, 128, 8
        $region44: #{tpu_custom_call.1} parent=39 // pred_fallthru
          _
      $region40: #{tpu_custom_call.1} parent=5 // pred_fallthru
        _
      %p1308 = scmp.le.s32.totalorder 2, %s14
      // Predicated region
      $region45: #{tpu_custom_call.1} parent=5 // pred_check
        %p1309 = pneg %p1308
      $region46: #{tpu_custom_call.1} parent=5 // pred_check_branch
        %1311 = sbr.rel (%p1309) target = $region48
      $region47: #{tpu_custom_call.1} parent=5 // pred_region
        %s1312 = ssub.s32 %s14, 2
        // Predicated region
        $region49: #{tpu_custom_call.1} parent=47 // pred_check
          %p1313 = pneg %p153
        $region50: #{tpu_custom_call.1} parent=47 // pred_check_branch
          %1315 = sbr.rel (%p1313) target = $region52
        $region51: #{tpu_custom_call.1} parent=47 // pred_region
          %s1316 = sand.u32 %s138, 1
          %s1317 = scalar_lea.sflag [#allocation3], %s1316
          %s1318 = sand.u32 %s138, 1
          %s1319 = smul.addr %s1318, 256
          %s1320 = scalar_lea.vmem [#allocation2], %s1319
          %1322 = dma.done %s1317, 4096
        $region52: #{tpu_custom_call.1} parent=47 // pred_fallthru
          _
      $region48: #{tpu_custom_call.1} parent=5 // pred_fallthru
        _
    $region6: #{tpu_custom_call.1} parent=1 // loop_footer
      %s18 = sadd.s32 1, %s14
    $region7: #{tpu_custom_call.1} parent=1 // loop_footer_branch
      %13 = sbr.rel target = $region3
    $region8: #{tpu_custom_call.1} parent=1 // loop_exit
      _
    %1323 = vsyncpa [#allocation3], 1
    %s1324 = scalar_lea.sflag [#allocation3], 1
    %1325 = vsyncpa %s1324, 1

</llo_original>
